<compile_context>
chip_gen: v7x
topology: tpu7x:2x2x1
jax: 0.10.0
libtpu: 0.0.40
codegen_flags: <defaults>
</compile_context>

<pallas_src>
import jax
import jax.numpy as jnp
from jax.experimental import pallas as pl
from jax.experimental.pallas import tpu as pltpu


# ----------------------------------------------------------------------------
# Pallas kernel: single-shot GEMM with fused per-channel scale/bias + activation
# ----------------------------------------------------------------------------
def _round_up(x, m):
    return (x + m - 1) // m * m


_ACTS = {
    "leaky": lambda y: jnp.where(y > 0, y, 0.2 * y),   # LeakyReLU(0.2)
    "relu": lambda y: jnp.maximum(y, 0.0),
    "tanh": jnp.tanh,
    "identity": lambda y: y,
}


def _make_kernel(act_fn):
    # o = act((x @ w) * scale + bias); x/w tiles are bf16, accumulate in f32.
    def kernel(x_ref, w_ref, s_ref, b_ref, o_ref):
        y = jnp.dot(x_ref[...], w_ref[...], preferred_element_type=jnp.float32)
        y = y * s_ref[...] + b_ref[...]
        o_ref[...] = act_fn(y).astype(o_ref.dtype)

    return kernel


_KERNELS = {name: _make_kernel(fn) for name, fn in _ACTS.items()}

_X_PANEL_BYTES = 4 << 20    # bf16 x panel (tm, Kp) budget
_W_PANEL_BYTES = 4 << 20    # bf16 w panel (Kp, tn) budget
_ACC_BYTES = 2 << 20        # f32 (tm, tn) accumulator budget


def fused_matmul_act(x, w, scale, bias, act, out_dtype=jnp.bfloat16):
    """act((x @ w) * scale + bias), GEMM + epilogue inside one Pallas kernel.

    Tiling: full-K blocks (no k loop, no accumulator scratch).  tm adapts to M
    (multiple of 16 for bf16 sublane packing, <= 1024, x panel <= 4 MiB bf16).
    tn adapts to N (widest of 1024/512/256/128 that keeps the weight panel
    <= 4 MiB, the f32 accumulator <= 2 MiB and the grid >= 2 steps).
    grid = (I, J) with j innermost so the x panel is VMEM-resident per i.
    """
    M, K = x.shape
    K2, N = w.shape
    assert K == K2
    Kp = _round_up(K, 128)

    # Row tile.
    tm = min(1024, _round_up(M, 16))
    while tm > 64 and tm * Kp * 2 > _X_PANEL_BYTES:
        tm //= 2
    Mp = _round_up(M, tm)

    # Column tile (lane-dense multiples of 128).
    Np = _round_up(N, 128)
    tn = 128
    for cand in (1024, 512, 256):
        if (Np % cand == 0
                and Kp * cand * 2 <= _W_PANEL_BYTES
                and tm * cand * 4 <= _ACC_BYTES
                and (Mp // tm) * (Np // cand) >= 2):
            tn = cand
            break

    xp = jnp.pad(x.astype(jnp.bfloat16), ((0, Mp - M), (0, Kp - K)))
    wp = jnp.pad(w.astype(jnp.bfloat16), ((0, Kp - K), (0, Np - N)))
    sp = jnp.pad(scale.reshape(1, N).astype(jnp.float32), ((0, 0), (0, Np - N)))
    bp = jnp.pad(bias.reshape(1, N).astype(jnp.float32), ((0, 0), (0, Np - N)))

    grid = (Mp // tm, Np // tn)   # (I, J): j innermost -> x resident per i
    out = pl.pallas_call(
        _KERNELS[act],
        out_shape=jax.ShapeDtypeStruct((Mp, Np), out_dtype),
        grid_spec=pltpu.PrefetchScalarGridSpec(
            num_scalar_prefetch=0,
            grid=grid,
            in_specs=[
                pl.BlockSpec((tm, Kp), lambda i, j: (i, 0)),
                pl.BlockSpec((Kp, tn), lambda i, j: (0, j)),
                pl.BlockSpec((1, tn), lambda i, j: (0, j)),
                pl.BlockSpec((1, tn), lambda i, j: (0, j)),
            ],
            out_specs=pl.BlockSpec((tm, tn), lambda i, j: (i, j)),
        ),
        compiler_params=pltpu.CompilerParams(
            dimension_semantics=("parallel", "parallel"),
            vmem_limit_bytes=32 * 1024 * 1024,
        ),
    )(xp, wp, sp, bp)
    return out[:M, :N]


# ----------------------------------------------------------------------------
# Conv2d (k=4, s=2, p=1) via bf16 im2col GEMM
# ----------------------------------------------------------------------------
def conv_down(x, w, scale, bias, act, pad_mode, out_dtype=jnp.bfloat16):
    """Conv2d(kernel=4, stride=2, padding=1). x: (N,H,W,Cin); w: (Cout,Cin,4,4)."""
    N, H, W, Cin = x.shape
    Cout = w.shape[0]
    Ho, Wo = H // 2, W // 2
    xp = jnp.pad(x.astype(jnp.bfloat16), ((0, 0), (1, 1), (1, 1), (0, 0)),
                 mode=pad_mode)
    slices = [xp[:, kh:kh + H:2, kw:kw + W:2, :]
              for kh in range(4) for kw in range(4)]
    patches = jnp.concatenate(slices, axis=-1).reshape(N * Ho * Wo, 16 * Cin)
    # weight row index = (kh*4 + kw)*Cin + ci, matching patch feature order
    wmat = jnp.concatenate(
        [w[:, :, kh, kw].T for kh in range(4) for kw in range(4)], axis=0)
    y = fused_matmul_act(patches, wmat, scale, bias, act, out_dtype=out_dtype)
    return y.reshape(N, Ho, Wo, Cout)


# ----------------------------------------------------------------------------
# ConvTranspose2d (k=4, s=2, p=1) via ONE GEMM + 2x2 overlap-add epilogue
# ----------------------------------------------------------------------------
# For output row 2h+a, the transposed conv sums (input-row offset, kernel tap):
_T_TAPS = {0: ((0, 1), (-1, 3)), 1: ((0, 2), (1, 0))}


def conv_transpose_up(x, w, scale, bias, act, out_dtype=jnp.bfloat16):
    """ConvTranspose2d(kernel=4, stride=2, padding=1).
    x: (N,H,W,Cin); w: (Cin,Cout,4,4) -> (N,2H,2W,Cout).

    y16[n,h,w,kh,kw,co] = scale[co] * sum_ci x[n,h,w,ci] * w[ci,co,kh,kw]   (Pallas GEMM)
    out[n,2h+a,2w+b,co] = act(bias[co] + sum of the four overlapping taps)  (epilogue)
    """
    N, H, W, Cin = x.shape
    Cout = w.shape[1]
    # W': (Cin, 16*Cout), column index = (kh*4 + kw)*Cout + co
    wmat = jnp.transpose(w, (0, 2, 3, 1)).reshape(Cin, 16 * Cout)
    y = fused_matmul_act(
        x.reshape(N * H * W, Cin), wmat,
        jnp.tile(scale, 16), jnp.zeros((16 * Cout,), jnp.float32),
        "identity", out_dtype=jnp.bfloat16)
    y = y.reshape(N, H, W, 4, 4, Cout)
    yp = jnp.pad(y, ((0, 0), (1, 1), (1, 1), (0, 0), (0, 0), (0, 0)))
    rows = []
    for a in (0, 1):
        cols = []
        for b in (0, 1):
            acc = jnp.zeros((N, H, W, Cout), jnp.float32)
            for dh, kh in _T_TAPS[a]:
                for dw, kw in _T_TAPS[b]:
                    acc = acc + yp[:, 1 + dh:1 + dh + H, 1 + dw:1 + dw + W,
                                   kh, kw, :].astype(jnp.float32)
            cols.append(acc)
        rows.append(jnp.stack(cols, axis=3))          # (N, H, W, 2, Cout)
    out = jnp.stack(rows, axis=2)                      # (N, H, 2, W, 2, Cout)
    out = out.reshape(N, 2 * H, 2 * W, Cout)
    out = _ACTS[act](out + bias.astype(jnp.float32))
    return out.astype(out_dtype)


# ----------------------------------------------------------------------------
# Parameter initialization (deterministic, synthetic)
# ----------------------------------------------------------------------------
def init_params(key, in_channels=3):
    feats = [64, 128, 256, 512, 512, 512, 512]
    keys = iter(jax.random.split(key, 96))
    nxt = lambda: next(keys)

    def conv_w(cout, cin):
        return jax.random.normal(nxt(), (cout, cin, 4, 4), jnp.float32) / jnp.sqrt(16.0 * cin)

    def convt_w(cin, cout):
        return jax.random.normal(nxt(), (cin, cout, 4, 4), jnp.float32) / jnp.sqrt(16.0 * cin)

    def bias_v(c):
        return 0.01 * jax.random.normal(nxt(), (c,), jnp.float32)

    def bn_scale_bias(c):
        gamma = 1.0 + 0.1 * jax.random.normal(nxt(), (c,), jnp.float32)
        beta = 0.1 * jax.random.normal(nxt(), (c,), jnp.float32)
        mean = 0.01 * jax.random.normal(nxt(), (c,), jnp.float32)
        var = 1.0 + 0.1 * jax.random.uniform(nxt(), (c,), jnp.float32)
        scale = gamma / jnp.sqrt(var + 1e-5)
        return scale, beta - mean * scale

    p = {}
    p["initial_down"] = dict(w=conv_w(feats[0], in_channels),
                             scale=jnp.ones((feats[0],), jnp.float32),
                             bias=bias_v(feats[0]))
    downs = []
    for i in range(6):
        cin, cout = feats[i], feats[i + 1]
        s, b = bn_scale_bias(cout)
        downs.append(dict(w=conv_w(cout, cin), scale=s, bias=b))
    p["downs"] = downs
    p["bottleneck"] = dict(w=conv_w(feats[-1], feats[-1]),
                           scale=jnp.ones((feats[-1],), jnp.float32),
                           bias=bias_v(feats[-1]))
    rf = feats[::-1]  # [512, 512, 512, 512, 256, 128, 64]
    up_io = [(rf[0], rf[0]), (rf[0] * 2, rf[1]), (rf[1] * 2, rf[2]),
             (rf[2] * 2, rf[3]), (rf[3] * 2, rf[4]), (rf[4] * 2, rf[5]),
             (rf[5] * 2, rf[6])]
    ups = []
    for cin, cout in up_io:
        s, b = bn_scale_bias(cout)
        ups.append(dict(w=convt_w(cin, cout), scale=s, bias=b))
    p["ups"] = ups
    p["final"] = dict(w=convt_w(rf[-1] * 2, in_channels),
                      scale=jnp.ones((in_channels,), jnp.float32),
                      bias=bias_v(in_channels))
    return p


# ----------------------------------------------------------------------------
# Generator forward pass (U-Net with skip connections)
# ----------------------------------------------------------------------------
@jax.jit
def generator_forward(params, x_nchw):
    x = jnp.transpose(x_nchw, (0, 2, 3, 1))  # NCHW -> NHWC

    pd = params["initial_down"]
    d = [conv_down(x, pd["w"], pd["scale"], pd["bias"], "leaky", "reflect")]
    for blk in params["downs"]:
        d.append(conv_down(d[-1], blk["w"], blk["scale"], blk["bias"],
                           "leaky", "reflect"))
    pb = params["bottleneck"]
    bott = conv_down(d[-1], pb["w"], pb["scale"], pb["bias"], "relu", "constant")

    skips = d[::-1]  # [down7, down6, ..., down1]
    u = bott
    for i, blk in enumerate(params["ups"]):
        inp = u if i == 0 else jnp.concatenate([u, skips[i - 1]], axis=-1)
        u = conv_transpose_up(inp, blk["w"], blk["scale"], blk["bias"], "relu")
        # TODO(synk): Dropout on initial_up/up2/up3 is identity in eval mode.

    pf = params["final"]
    out = conv_transpose_up(jnp.concatenate([u, skips[-1]], axis=-1),
                            pf["w"], pf["scale"], pf["bias"], "tanh",
                            out_dtype=jnp.float32)
    return jnp.transpose(out, (0, 3, 1, 2))  # NHWC -> NCHW


# ----------------------------------------------------------------------------
# Small correctness checks of the conv decompositions vs. lax references
# (loose tolerance: bf16 GEMM operands vs f32 reference)
# ----------------------------------------------------------------------------
def _check_against_lax():
    ks = jax.random.split(jax.random.PRNGKey(42), 8)
    # --- Conv2d(k=4, s=2, p=1, reflect) ---
    x = jax.random.normal(ks[0], (1, 8, 10, 8), jnp.float32)
    w = 0.1 * jax.random.normal(ks[1], (16, 8, 4, 4), jnp.float32)
    s = 1.0 + 0.1 * jax.random.normal(ks[2], (16,), jnp.float32)
    b = 0.1 * jax.random.normal(ks[3], (16,), jnp.float32)
    got = conv_down(x, w, s, b, "leaky", "reflect", out_dtype=jnp.float32)
    xp = jnp.pad(x, ((0, 0), (1, 1), (1, 1), (0, 0)), mode="reflect")
    ref = jax.lax.conv_general_dilated(
        xp, jnp.transpose(w, (2, 3, 1, 0)), (2, 2), "VALID",
        dimension_numbers=("NHWC", "HWIO", "NHWC"))
    ref = _ACTS["leaky"](ref * s + b)
    err = jnp.max(jnp.abs(got - ref)) / (jnp.max(jnp.abs(ref)) + 1e-6)
    assert float(err) < 5e-2, f"conv_down mismatch: rel err {float(err)}"
    # --- ConvTranspose2d(k=4, s=2, p=1) ---
    x = jax.random.normal(ks[4], (1, 5, 6, 8), jnp.float32)
    w = 0.1 * jax.random.normal(ks[5], (8, 16, 4, 4), jnp.float32)
    s = 1.0 + 0.1 * jax.random.normal(ks[6], (16,), jnp.float32)
    b = 0.1 * jax.random.normal(ks[7], (16,), jnp.float32)
    got = conv_transpose_up(x, w, s, b, "relu", out_dtype=jnp.float32)
    wf = jnp.transpose(w, (2, 3, 0, 1))[::-1, ::-1]   # HWIO, spatially flipped
    ref = jax.lax.conv_general_dilated(
        x, wf, (1, 1), ((2, 2), (2, 2)), lhs_dilation=(2, 2),
        dimension_numbers=("NHWC", "HWIO", "NHWC"))
    ref = _ACTS["relu"](ref * s + b)
    err = jnp.max(jnp.abs(got - ref)) / (jnp.max(jnp.abs(ref)) + 1e-6)
    assert float(err) < 5e-2, f"conv_transpose_up mismatch: rel err {float(err)}"


if __name__ == "__main__":
    _check_against_lax()

    key = jax.random.PRNGKey(0)
    kp, kx = jax.random.split(key)
    params = init_params(kp)
    # Note: spatial=256 is the minimum the architecture supports
    # (8 stride-2 conv stages with kernel 4 / padding 1 down to 1x1).
    x = jax.random.normal(kx, (1, 3, 256, 256), jnp.float32)
    out = generator_forward(params, x)
    out = jax.block_until_ready(out)
    assert out.shape == (1, 3, 256, 256), out.shape
    assert bool(jnp.all(jnp.isfinite(out)))
    assert bool(jnp.all(jnp.abs(out) <= 1.0))  # tanh output range
    print("KERNEL_OK")
</pallas_src>

<mosaic_0001>
module attributes {stable_mosaic.version = 11 : i64} {
  func.func @kernel(%arg0: i32, %arg1: i32, %arg2: memref<32x128xbf16, #tpu.memory_space<vmem>>, %arg3: memref<128x128xbf16, #tpu.memory_space<vmem>>, %arg4: memref<1x128xf32, #tpu.memory_space<vmem>>, %arg5: memref<1x128xf32, #tpu.memory_space<vmem>>, %arg6: memref<32x128xf32, #tpu.memory_space<vmem>>) attributes {dimension_semantics = [#tpu.dimension_semantics<parallel>, #tpu.dimension_semantics<parallel>], iteration_bounds = array<i64: 1, 1>, scalar_prefetch = 0 : i64, scratch_operands = 0 : i64, tpu.core_type = #tpu.core_type<tc>, window_params = [{transform_indices = @transform_0, window_bounds = array<i64: 32, 128>}, {transform_indices = @transform_1, window_bounds = array<i64: 128, 128>}, {transform_indices = @transform_2, window_bounds = array<i64: 1, 128>}, {transform_indices = @transform_3, window_bounds = array<i64: 1, 128>}, {transform_indices = @transform_4, window_bounds = array<i64: 32, 128>}]} {
    %c0 = arith.constant 0 : index
    %c0_0 = arith.constant 0 : index
    %0 = vector.load %arg2[%c0, %c0_0] : memref<32x128xbf16, #tpu.memory_space<vmem>>, vector<32x128xbf16>
    %c0_1 = arith.constant 0 : index
    %c0_2 = arith.constant 0 : index
    %1 = vector.load %arg3[%c0_1, %c0_2] : memref<128x128xbf16, #tpu.memory_space<vmem>>, vector<128x128xbf16>
    %cst = arith.constant dense<0.000000e+00> : vector<32x128xf32>
    %2 = tpu.matmul %0, %1, %cst {dimension_numbers = #tpu.dot_dimension_numbers<[1], [0], [0], [1], [0, 0, 1, 1], [], []>} : vector<32x128xbf16>, vector<128x128xbf16>, vector<32x128xf32> -> vector<32x128xf32>
    %c0_3 = arith.constant 0 : index
    %c0_4 = arith.constant 0 : index
    %3 = vector.load %arg4[%c0_3, %c0_4] : memref<1x128xf32, #tpu.memory_space<vmem>>, vector<1x128xf32>
    %4 = vector.broadcast %3 : vector<1x128xf32> to vector<32x128xf32>
    %5 = arith.mulf %2, %4 : vector<32x128xf32>
    %c0_5 = arith.constant 0 : index
    %c0_6 = arith.constant 0 : index
    %6 = vector.load %arg5[%c0_5, %c0_6] : memref<1x128xf32, #tpu.memory_space<vmem>>, vector<1x128xf32>
    %7 = vector.broadcast %6 : vector<1x128xf32> to vector<32x128xf32>
    %8 = arith.addf %5, %7 : vector<32x128xf32>
    %cst_7 = arith.constant 0.000000e+00 : f32
    %9 = vector.broadcast %cst_7 : f32 to vector<32x128xf32>
    %10 = arith.cmpf ogt, %8, %9 : vector<32x128xf32>
    %cst_8 = arith.constant 2.000000e-01 : f32
    %11 = vector.broadcast %cst_8 : f32 to vector<32x128xf32>
    %12 = arith.mulf %11, %8 : vector<32x128xf32>
    %13 = arith.select %10, %8, %12 : vector<32x128xi1>, vector<32x128xf32>
    %c0_9 = arith.constant 0 : index
    %c0_10 = arith.constant 0 : index
    %14 = vector.load %arg6[%c0_9, %c0_10] : memref<32x128xf32, #tpu.memory_space<vmem>>, vector<32x128xf32>
    tpu.vector_store %arg6[%c0_9, %c0_10], %13 {strides = array<i32>} : memref<32x128xf32, #tpu.memory_space<vmem>>, vector<32x128xf32>,
    return
  }
  func.func @transform_0(%arg0: i32, %arg1: i32) -> (i32, i32) {
    %c0_i32 = arith.constant 0 : i32
    %c0_i32_0 = arith.constant 0 : i32
    return %arg0, %c0_i32 : i32, i32
  }
  func.func @transform_1(%arg0: i32, %arg1: i32) -> (i32, i32) {
    %c0_i32 = arith.constant 0 : i32
    %c0_i32_0 = arith.constant 0 : i32
    return %c0_i32, %arg1 : i32, i32
  }
  func.func @transform_2(%arg0: i32, %arg1: i32) -> (i32, i32) {
    %c0_i32 = arith.constant 0 : i32
    %c0_i32_0 = arith.constant 0 : i32
    return %c0_i32, %arg1 : i32, i32
  }
  func.func @transform_3(%arg0: i32, %arg1: i32) -> (i32, i32) {
    %c0_i32 = arith.constant 0 : i32
    %c0_i32_0 = arith.constant 0 : i32
    return %c0_i32, %arg1 : i32, i32
  }
  func.func @transform_4(%arg0: i32, %arg1: i32) -> (i32, i32) {
    %c0_i32 = arith.constant 0 : i32
    return %arg0, %arg1 : i32, i32
  }
}

</mosaic_0001>

<llo_original>
// kernel: tpu_custom_call.1
$region0: #{tpu_custom_call.1}
  #allocation0 [shape = 'u32[]', space=smem, size = 0x4, offset = 0x4, fixed_abs, tag = 'smem constant byte address 0x4 - core index']
  #allocation1 [shape = 'u32[144,128]{1,0:T(1,128)}', space=vmem, size = 0x12000, scoped, tag = 'internal scratch']
  %s0 = inlined_call_operand.hbm [shape: bf16[32,128], index: 0, kind: input, shape index: {}]
  %s1 = inlined_call_operand.hbm [shape: bf16[128,128], index: 1, kind: input, shape index: {}]
  %s2 = inlined_call_operand.vmem [shape: f32[1,128], index: 2, kind: input, shape index: {}]
  %s3 = inlined_call_operand.vmem [shape: f32[1,128], index: 3, kind: input, shape index: {}]
  %s4 = inlined_call_operand.hbm [shape: f32[32,128], index: 4, kind: output, shape index: {}]
  %s5 = sld [smem:[#allocation0]]
  $region34: #{tpu_custom_call.1} parent=0
    _
  %s7 = ssub.s32 1, %s5
  %s8 = scalar_select 0, %s7, %s5
  $region1: #{tpu_custom_call.1} parent=0
    #allocation2 [shape = 'u8[8192]{0}', space=vmem, size = 0x2000, scoped, tag = 'input window, operand 0, single buffered']
    #allocation3 [shape = 's32[1]{0}', space=sflag, size = 0x4, scoped, tag = 'scoped memory for tpu_custom_call.1']
    #allocation4 [shape = 's32[1]{0}', space=sflag, size = 0x4, scoped, tag = 'scoped memory for tpu_custom_call.1']
    #allocation5 [shape = 'u8[32768]{0}', space=vmem, size = 0x8000, scoped, tag = 'input window, operand 1, single buffered']
    #allocation6 [shape = 's32[1]{0}', space=sflag, size = 0x4, scoped, tag = 'scoped memory for tpu_custom_call.1']
    #allocation7 [shape = 'u8[16384]{0}', space=vmem, size = 0x4000, scoped, tag = 'output window, operand 0, single buffered']
    %9 = vsyncpa [#allocation3], 0
    %10 = vsyncpa [#allocation6], 0
    %11 = vsyncpa [#allocation4], 0
    // Predicated region
    $region2: #{tpu_custom_call.1} parent=1 // pred_check
      _
    $region3: #{tpu_custom_call.1} parent=1 // pred_check_branch
      %13 = sbr.rel (0) target = $region5
    $region4: #{tpu_custom_call.1} parent=1 // pred_region
      %s15 = ssub.s32 256, 256
      %16 = vsyncadd [#allocation3], %s15
      %s17 = sshll.u32 [#allocation2], 4
      %s18 = int_to_ptr.vmem [resolvable:$true] %s17
      %23 = dma.hbm_to_vmem [thread:$0]  %s0, 256, %s18, [#allocation3], 64, 64, 4
    $region5: #{tpu_custom_call.1} parent=1 // pred_fallthru
      _
    // Predicated region
    $region6: #{tpu_custom_call.1} parent=1 // pred_check
      _
    $region7: #{tpu_custom_call.1} parent=1 // pred_check_branch
      %25 = sbr.rel (0) target = $region9
    $region8: #{tpu_custom_call.1} parent=1 // pred_region
      %s27 = ssub.s32 1024, 1024
      %28 = vsyncadd [#allocation6], %s27
      %s29 = sshll.u32 [#allocation5], 4
      %s30 = int_to_ptr.vmem [resolvable:$true] %s29
      %35 = dma.hbm_to_vmem [thread:$0]  %s1, 1024, %s30, [#allocation6], 64, 64, 4
    $region9: #{tpu_custom_call.1} parent=1 // pred_fallthru
      _
    // Predicated region
    $region10: #{tpu_custom_call.1} parent=1 // pred_check
      _
    $region11: #{tpu_custom_call.1} parent=1 // pred_check_branch
      %37 = sbr.rel (0) target = $region13
    $region12: #{tpu_custom_call.1} parent=1 // pred_region
      _
    $region13: #{tpu_custom_call.1} parent=1 // pred_fallthru
      _
    // Predicated region
    $region14: #{tpu_custom_call.1} parent=1 // pred_check
      _
    $region15: #{tpu_custom_call.1} parent=1 // pred_check_branch
      %39 = sbr.rel (0) target = $region17
    $region16: #{tpu_custom_call.1} parent=1 // pred_region
      _
    $region17: #{tpu_custom_call.1} parent=1 // pred_fallthru
      _
    // Predicated region
    $region18: #{tpu_custom_call.1} parent=1 // pred_check
      _
    $region19: #{tpu_custom_call.1} parent=1 // pred_check_branch
      %41 = sbr.rel (0) target = $region21
    $region20: #{tpu_custom_call.1} parent=1 // pred_region
      %42 = dma.done [#allocation3], 256
    $region21: #{tpu_custom_call.1} parent=1 // pred_fallthru
      _
    // Predicated region
    $region22: #{tpu_custom_call.1} parent=1 // pred_check
      _
    $region23: #{tpu_custom_call.1} parent=1 // pred_check_branch
      %44 = sbr.rel (0) target = $region25
    $region24: #{tpu_custom_call.1} parent=1 // pred_region
      %45 = dma.done [#allocation6], 1024
    $region25: #{tpu_custom_call.1} parent=1 // pred_fallthru
      _
    %v47 = vld [vmem:[#allocation2] sm:$0xf]
    %v48 = vld [vmem:[#allocation2 + $0x4] sm:$0xf]
    %v49 = vld [vmem:[#allocation2 + $0x8] sm:$0xf]
    %v50 = vld [vmem:[#allocation2 + $0xc] sm:$0xf]
    %v51 = vld [vmem:[#allocation5] sm:$0xf]
    %v52 = vld [vmem:[#allocation5 + $0x4] sm:$0xf]
    %v53 = vld [vmem:[#allocation5 + $0x8] sm:$0xf]
    %v54 = vld [vmem:[#allocation5 + $0xc] sm:$0xf]
    %v55 = vld [vmem:[#allocation5 + $0x10] sm:$0xf]
    %v56 = vld [vmem:[#allocation5 + $0x14] sm:$0xf]
    %v57 = vld [vmem:[#allocation5 + $0x18] sm:$0xf]
    %v58 = vld [vmem:[#allocation5 + $0x1c] sm:$0xf]
    %v59 = vld [vmem:[#allocation5 + $0x20] sm:$0xf]
    %v60 = vld [vmem:[#allocation5 + $0x24] sm:$0xf]
    %v61 = vld [vmem:[#allocation5 + $0x28] sm:$0xf]
    %v62 = vld [vmem:[#allocation5 + $0x2c] sm:$0xf]
    %v63 = vld [vmem:[#allocation5 + $0x30] sm:$0xf]
    %v64 = vld [vmem:[#allocation5 + $0x34] sm:$0xf]
    %v65 = vld [vmem:[#allocation5 + $0x38] sm:$0xf]
    %v66 = vld [vmem:[#allocation5 + $0x3c] sm:$0xf]
    %v71 = vunpack.c.l.b16 %v47
    %v72 = vunpack.c.l.b16 %v48
    %v73 = vunpack.c.l.b16 %v49
    %v74 = vunpack.c.l.b16 %v50
    %v75 = vpack.c.b16 %v72, %v71
    %v76 = vpack.c.b16 %v74, %v73
    %v95 = vunpack.c.l.b16 %v51
    %v96 = vunpack.c.l.b16 %v52
    %v97 = vunpack.c.l.b16 %v53
    %v98 = vunpack.c.l.b16 %v54
    %v99 = vunpack.c.l.b16 %v55
    %v100 = vunpack.c.l.b16 %v56
    %v101 = vunpack.c.l.b16 %v57
    %v102 = vunpack.c.l.b16 %v58
    %v103 = vunpack.c.l.b16 %v59
    %v104 = vunpack.c.l.b16 %v60
    %v105 = vunpack.c.l.b16 %v61
    %v106 = vunpack.c.l.b16 %v62
    %v107 = vunpack.c.l.b16 %v63
    %v108 = vunpack.c.l.b16 %v64
    %v109 = vunpack.c.l.b16 %v65
    %v110 = vunpack.c.l.b16 %v66
    %v111 = vpack.c.b16 %v96, %v95
    %v112 = vpack.c.b16 %v98, %v97
    %v113 = vpack.c.b16 %v100, %v99
    %v114 = vpack.c.b16 %v102, %v101
    %v115 = vpack.c.b16 %v104, %v103
    %v116 = vpack.c.b16 %v106, %v105
    %v117 = vpack.c.b16 %v108, %v107
    %v118 = vpack.c.b16 %v110, %v109
    %127 = vmatprep.subr.bf16.mxu0 0
    %128 = vmatpush1.bf16.msra.mxu0 %v111
    %129 = vmatprep.subr.bf16.mxu0 0
    %130 = vmatpush1.bf16.msra.mxu0 %v112
    %131 = vmatprep.subr.bf16.mxu0 0
    %132 = vmatpush1.bf16.msra.mxu0 %v113
    %133 = vmatprep.subr.bf16.mxu0 0
    %134 = vmatpush1.bf16.msra.mxu0 %v114
    %135 = vmatprep.subr.bf16.mxu0 0
    %136 = vmatpush1.bf16.msra.mxu0 %v115
    %137 = vmatprep.subr.bf16.mxu0 0
    %138 = vmatpush1.bf16.msra.mxu0 %v116
    %139 = vmatprep.subr.bf16.mxu0 0
    %140 = vmatpush1.bf16.msra.mxu0 %v117
    %141 = vmatprep.subr.bf16.mxu0 0
    %142 = vmatpush1.bf16.msra.mxu0 %v118
    %143 = vmatprep.subr.bf16.mxu0 0
    %144 = vmatpush1.bf16.msra.mxu0 0
    %145 = vmatprep.subr.bf16.mxu0 0
    %146 = vmatpush1.bf16.msra.mxu0 0
    %147 = vmatprep.subr.bf16.mxu0 0
    %148 = vmatpush1.bf16.msra.mxu0 0
    %149 = vmatprep.subr.bf16.mxu0 0
    %150 = vmatpush1.bf16.msra.mxu0 0
    %151 = vmatprep.subr.bf16.mxu0 0
    %152 = vmatpush1.bf16.msra.mxu0 0
    %153 = vmatprep.subr.bf16.mxu0 0
    %154 = vmatpush1.bf16.msra.mxu0 0
    %155 = vmatprep.subr.bf16.mxu0 0
    %156 = vmatpush1.bf16.msra.mxu0 0
    %157 = vmatprep.subr.bf16.mxu0 0
    %158 = vmatpush1.bf16.msra.mxu0 0
    %159 = vmatprep.mubr.bf16.mxu0 0
    %160 = vmatmul.mubr.bf16.gmra.mrb[0].mxu0 %v75
    %v161 = vpop.f32.mrb[0].mxu0
    %v162 = vadd.f32 0.0, %v161
    %v163 = vpop.f32.mrb[0].mxu0
    %v164 = vpop.f32.mrb[0].mxu0
    %v165 = vadd.f32 0.0, %v164
    %v166 = vpop.f32.mrb[0].mxu0
    %167 = vmatprep.mubr.bf16.mxu0 0
    %168 = vmatmul.mubr.bf16.gmra.mrb[0].mxu0 %v76
    %v169 = vpop.f32.mrb[0].mxu0
    %v170 = vadd.f32 0.0, %v169
    %v171 = vpop.f32.mrb[0].mxu0
    %v172 = vpop.f32.mrb[0].mxu0
    %v173 = vadd.f32 0.0, %v172
    %v174 = vpop.f32.mrb[0].mxu0
    %175 = vdwg.mxu0
    %v176 = vld [vmem:[%s2] sm:$0x1]
    %v178 = vlaneseq
    %v179 = vshrl.u32 %v178, 7
    %v180 = vsub.s32 0, %v179
    %v181 = vrot.slane %v176, %v180
    %v183 = vmul.f32 %v162, %v181
    %v184 = vmul.f32 %v165, %v181
    %v185 = vmul.f32 %v170, %v181
    %v186 = vmul.f32 %v173, %v181
    %v187 = vld [vmem:[%s3] sm:$0x1]
    %v189 = vlaneseq
    %v190 = vshrl.u32 %v189, 7
    %v191 = vsub.s32 0, %v190
    %v192 = vrot.slane %v187, %v191
    %v194 = vadd.f32 %v183, %v192
    %v195 = vadd.f32 %v184, %v192
    %v196 = vadd.f32 %v185, %v192
    %v197 = vadd.f32 %v186, %v192
    %vm198 = vcmp.gt.f32.partialorder %v194, 0.0
    %vm199 = vcmp.gt.f32.partialorder %v195, 0.0
    %vm200 = vcmp.gt.f32.partialorder %v196, 0.0
    %vm201 = vcmp.gt.f32.partialorder %v197, 0.0
    %v202 = vmul.f32 %v194, 0.2
    %v203 = vmul.f32 %v195, 0.2
    %v204 = vmul.f32 %v196, 0.2
    %v205 = vmul.f32 %v197, 0.2
    %v206 = vsel %vm198, %v194, %v202
    %v207 = vsel %vm199, %v195, %v203
    %v208 = vsel %vm200, %v196, %v204
    %v209 = vsel %vm201, %v197, %v205
    %210 = vst [vmem:[#allocation7] sm:$0xff] %v206
    %211 = vst [vmem:[#allocation7 + $0x8] sm:$0xff] %v207
    %212 = vst [vmem:[#allocation7 + $0x10] sm:$0xff] %v208
    %213 = vst [vmem:[#allocation7 + $0x18] sm:$0xff] %v209
    // Predicated region
    $region26: #{tpu_custom_call.1} parent=1 // pred_check
      _
    $region27: #{tpu_custom_call.1} parent=1 // pred_check_branch
      %215 = sbr.rel (0) target = $region29
    $region28: #{tpu_custom_call.1} parent=1 // pred_region
      %s217 = ssub.s32 512, 512
      %218 = vsyncadd [#allocation4], %s217
      %s219 = sshll.u32 [#allocation7], 4
      %s220 = int_to_ptr.vmem [resolvable:$true] %s219
      %225 = dma.vmem_to_hbm [thread:$0]  %s220, 512, %s4, [#allocation4], 128, 128, 8
    $region29: #{tpu_custom_call.1} parent=1 // pred_fallthru
      _
    // Predicated region
    $region30: #{tpu_custom_call.1} parent=1 // pred_check
      _
    $region31: #{tpu_custom_call.1} parent=1 // pred_check_branch
      %227 = sbr.rel (0) target = $region33
    $region32: #{tpu_custom_call.1} parent=1 // pred_region
      %228 = dma.done [#allocation4], 512
    $region33: #{tpu_custom_call.1} parent=1 // pred_fallthru
      _
    %229 = vsyncpa [#allocation3], 1
    %230 = vsyncpa [#allocation6], 1
    %231 = vsyncpa [#allocation4], 1

</llo_original>
